<compile_context>
chip_gen: v7x
topology: tpu7x:2x2x1
jax: 0.10.0
libtpu: 0.0.40
codegen_flags: <defaults>
</compile_context>

<pallas_src>
import jax
import jax.numpy as jnp
import numpy as np
from jax import lax
from jax.experimental import pallas as pl
from jax.experimental.pallas import tpu as pltpu


# ---------------------------------------------------------------------------
# Helpers
# ---------------------------------------------------------------------------
def _round_up(x, m):
    return ((x + m - 1) // m) * m


def _pick_tile(dim, preferred, align):
    """Largest divisor of `dim` <= preferred that is a multiple of `align`."""
    for cand in range(min(preferred, dim), 0, -1):
        if dim % cand == 0 and cand % align == 0:
            return cand
    return dim


def _vmem_capacity_bytes():
    try:
        info = pltpu.get_tpu_info()
        cap = getattr(info, "vmem_capacity_bytes", None)
        if cap:
            return int(cap)
    except Exception:
        pass
    return 64 * 1024 * 1024  # conservative (v7x per-core VMEM)


def _qparams_from_minmax(mn, mx):
    """scale / zero_point / do_quant flag, matching FakeQuantize.forward."""
    mn = mn.astype(jnp.float32)
    mx = mx.astype(jnp.float32)
    doq = (mx - mn) >= 1e-8
    scale = jnp.where(doq, (mx - mn) / 255.0, jnp.float32(1.0))
    zp = jnp.clip(0.0 - jnp.round(mn / scale), 0.0, 255.0)
    zp = jnp.where(doq, zp, jnp.float32(0.0))
    return jnp.stack([scale, zp, doq.astype(jnp.float32)]).astype(jnp.float32)


# ---------------------------------------------------------------------------
# Kernels
# ---------------------------------------------------------------------------
def _make_head_kernel(tm, tn, m_valid, v_valid, chunk_row0, mask_rows, mask_cols):
    def kernel(qp_ref, x_ref, w_ref, b_ref,
               out_ref, min_ref, max_ref,
               wq_ref, mn_ref, mx_ref):
        j = pl.program_id(0)          # vocab stripe (outer, parallel)
        i = pl.program_id(1)          # token tile  (inner, arbitrary)
        ni = pl.num_programs(1)

        @pl.when(i == 0)
        def _prep_stripe():
            # Channel-wise symmetric weight fake-quant, ONCE per stripe, and
            # stored TRANSPOSED (H, tn) so the inner matmul is MXU-native.
            # Divisions kept (not reciprocal-mul) for bit-fidelity with the
            # reference; they run once per weight element, not per grid cell.
            wt = w_ref[...].astype(jnp.float32).T                 # (H, tn)
            wmax = jnp.max(jnp.abs(wt), axis=0, keepdims=True)    # (1, tn)
            wscale = jnp.maximum(wmax / 127.0, 1e-8)
            w_int = jnp.clip(jnp.round(wt / wscale), -128.0, 127.0)
            wq_ref[...] = w_int * wscale
            mn_ref[...] = jnp.full(mn_ref.shape, jnp.inf, mn_ref.dtype)
            mx_ref[...] = jnp.full(mx_ref.shape, -jnp.inf, mx_ref.dtype)

        # Act-in fake-quant of just this (tm, H) slice of the resident x block
        # (megacore-safe; VPU cost hides under the MXU inner loop).
        scale = qp_ref[0]
        zp = qp_ref[1]
        doq = qp_ref[2]
        row0 = pl.multiple_of(i * tm, tm)
        x = x_ref[pl.ds(row0, tm), :].astype(jnp.float32)
        x_int = jnp.clip(jnp.round(x / scale + zp), 0.0, 255.0)
        xq = jnp.where(doq > 0.5, (x_int - zp) * scale, x)

        out = jnp.dot(xq, wq_ref[...], preferred_element_type=jnp.float32)
        out = out + b_ref[...].astype(jnp.float32)                # (1, tn)
        out_ref[...] = out

        # Running per-lane min/max (sublane reduce only per step).  Padded
        # rows/cols are excluded so the act-out observer matches the reference.
        omin, omax = out, out
        if mask_rows or mask_cols:
            valid = None
            if mask_rows:
                rows = (chunk_row0 + row0
                        + lax.broadcasted_iota(jnp.int32, (tm, 1), 0))
                valid = rows < m_valid
            if mask_cols:
                cols = j * tn + lax.broadcasted_iota(jnp.int32, (1, tn), 1)
                cvalid = cols < v_valid
                valid = cvalid if valid is None else jnp.logical_and(valid, cvalid)
            omin = jnp.where(valid, out, jnp.inf)
            omax = jnp.where(valid, out, -jnp.inf)
        mn_ref[...] = jnp.minimum(mn_ref[...], jnp.min(omin, axis=0, keepdims=True))
        mx_ref[...] = jnp.maximum(mx_ref[...], jnp.max(omax, axis=0, keepdims=True))

        @pl.when(i == ni - 1)
        def _finish_stripe():
            # One cross-lane reduce per stripe, then a lane-dense (8,128) write.
            smn = jnp.min(mn_ref[...], axis=1, keepdims=True)     # (1, 1)
            smx = jnp.max(mx_ref[...], axis=1, keepdims=True)
            min_ref[...] = jnp.broadcast_to(smn, min_ref.shape)
            max_ref[...] = jnp.broadcast_to(smx, max_ref.shape)

    return kernel


def _act_out_quant_kernel(qp_ref, y_ref, o_ref):
    scale = qp_ref[0]
    zp = qp_ref[1]
    doq = qp_ref[2]
    y = y_ref[...]
    y_int = jnp.clip(jnp.round(y / scale + zp), 0.0, 255.0)
    o_ref[...] = jnp.where(doq > 0.5, (y_int - zp) * scale, y)


# ---------------------------------------------------------------------------
# Wrapper
# ---------------------------------------------------------------------------
def bit_bert_lm_prediction_head(hidden_states, weight, bias):
    """Pallas implementation of BitBertLMPredictionHead.forward (training-mode
    observers starting from fresh +-inf buffers, as in the PyTorch module)."""
    B, S, H = hidden_states.shape
    V, H2 = weight.shape
    assert H == H2
    M = B * S

    x2 = hidden_states.reshape(M, H)
    qp_in = _qparams_from_minmax(jnp.min(x2), jnp.max(x2))

    # ---- generation-aware tile / VMEM budget ----
    vmem_cap = _vmem_capacity_bytes()
    if vmem_cap >= 100 * 1024 * 1024:            # v5e / v6e: 128 MiB VMEM
        tm_pref, tn_pref = 512, 1024
        x_budget = 24 * 1024 * 1024
        main_vmem_cap = 100 * 1024 * 1024
    else:                                        # v7x: 64 MiB VMEM per core
        tm_pref, tn_pref = 256, 512
        x_budget = 8 * 1024 * 1024
        main_vmem_cap = 56 * 1024 * 1024

    # ---- vocab: pad to a lane-dense multiple of the stripe width; keep the
    #      stripe count even so the two v7x TensorCores split evenly ----
    tn = min(tn_pref, _round_up(V, 128))
    V_pad = _round_up(V, tn)
    nj = V_pad // tn
    if nj % 2 == 1 and tn % 256 == 0:
        tn //= 2
        nj *= 2
    w_p = weight
    b_p = bias.astype(jnp.float32).reshape(1, V)
    if V_pad != V:
        w_p = jnp.pad(w_p, ((0, V_pad - V), (0, 0)))
        b_p = jnp.pad(b_p, ((0, 0), (0, V_pad - V)))

    # ---- tokens: pad to a sublane multiple and chunk so the resident
    #      activation block fits the VMEM budget ----
    M_pad = _round_up(M, 8)
    x_p = x2 if M_pad == M else jnp.pad(x2, ((0, M_pad - M), (0, 0)))
    rows_chunk = max(8, (x_budget // (H * 4)) // 8 * 8)
    rows_chunk = min(rows_chunk, M_pad)

    chunk_logits = []
    gmin = jnp.array(jnp.inf, jnp.float32)
    gmax = jnp.array(-jnp.inf, jnp.float32)
    row0 = 0
    while row0 < M_pad:
        Mc = min(rows_chunk, M_pad - row0)
        x_c = x_p[row0:row0 + Mc]
        tm = _pick_tile(Mc, tm_pref, 8)
        ni = Mc // tm
        kernel = _make_head_kernel(
            tm, tn, M, V, row0,
            mask_rows=(row0 + Mc > M), mask_cols=(V_pad != V))
        vmem_est = 4 * (2 * Mc * H + 3 * tn * H + 2 * tm * tn
                        + 4 * 8 * tn + 4 * 8 * 128)
        vmem_limit = int(min(max(vmem_est + (4 << 20), 16 << 20), main_vmem_cap))

        out_c, mins_c, maxs_c = pl.pallas_call(
            kernel,
            out_shape=(
                jax.ShapeDtypeStruct((Mc, V_pad), jnp.float32),    # logits
                jax.ShapeDtypeStruct((nj * 8, 128), jnp.float32),  # stripe mins
                jax.ShapeDtypeStruct((nj * 8, 128), jnp.float32),  # stripe maxs
            ),
            grid=(nj, ni),                       # vocab OUTER, tokens INNER
            in_specs=[
                pl.BlockSpec(memory_space=pltpu.MemorySpace.SMEM),  # act-in qparams
                pl.BlockSpec((Mc, H), lambda j, i: (0, 0)),         # resident x chunk
                pl.BlockSpec((tn, H), lambda j, i: (j, 0)),         # weight stripe
                pl.BlockSpec((1, tn), lambda j, i: (0, j)),         # bias
            ],
            out_specs=(
                pl.BlockSpec((tm, tn), lambda j, i: (i, j)),
                pl.BlockSpec((8, 128), lambda j, i: (j, 0)),
                pl.BlockSpec((8, 128), lambda j, i: (j, 0)),
            ),
            scratch_shapes=[
                pltpu.VMEM((H, tn), jnp.float32),   # resident transposed w_q
                pltpu.VMEM((1, tn), jnp.float32),   # running per-lane min
                pltpu.VMEM((1, tn), jnp.float32),   # running per-lane max
            ],
            compiler_params=pltpu.CompilerParams(
                dimension_semantics=("parallel", "arbitrary"),
                vmem_limit_bytes=vmem_limit),
        )(qp_in, x_c, w_p, b_p)

        chunk_logits.append(out_c)
        gmin = jnp.minimum(gmin, jnp.min(mins_c))
        gmax = jnp.maximum(gmax, jnp.max(maxs_c))
        row0 += Mc

    # ---- act-out fake-quant: lane-dense elementwise pass, in place ----
    qp_out = _qparams_from_minmax(gmin, gmax)
    tn2 = _pick_tile(V_pad, 2048, 128)
    quant_chunks = []
    for out_c in chunk_logits:
        Mc = out_c.shape[0]
        tm2 = _pick_tile(Mc, 512, 8)
        vmem2 = int(min(max(4 * (4 * tm2 * tn2) + (4 << 20), 16 << 20),
                        48 * 1024 * 1024))
        out_q_c = pl.pallas_call(
            _act_out_quant_kernel,
            out_shape=jax.ShapeDtypeStruct((Mc, V_pad), jnp.float32),
            grid=(Mc // tm2, V_pad // tn2),
            in_specs=[
                pl.BlockSpec(memory_space=pltpu.MemorySpace.SMEM),
                pl.BlockSpec((tm2, tn2), lambda i, j: (i, j)),
            ],
            out_specs=pl.BlockSpec((tm2, tn2), lambda i, j: (i, j)),
            input_output_aliases={1: 0},         # re-quantize the logits in place
            compiler_params=pltpu.CompilerParams(
                dimension_semantics=("parallel", "parallel"),
                vmem_limit_bytes=vmem2),
        )(qp_out, out_c)
        quant_chunks.append(out_q_c)

    out_q = (quant_chunks[0] if len(quant_chunks) == 1
             else jnp.concatenate(quant_chunks, axis=0))
    out_q = out_q[:M, :V]
    return out_q.reshape(B, S, V)


# ---------------------------------------------------------------------------
# Pure-JAX reference of the PyTorch forward (training mode, fresh buffers)
# ---------------------------------------------------------------------------
def _reference(hidden_states, weight, bias):
    B, S, H = hidden_states.shape
    V = weight.shape[0]
    x = hidden_states.reshape(B * S, H).astype(jnp.float32)

    def fq_act(t):
        qp = _qparams_from_minmax(jnp.min(t), jnp.max(t))
        scale, zp, doq = qp[0], qp[1], qp[2]
        tq = (jnp.clip(jnp.round(t / scale + zp), 0.0, 255.0) - zp) * scale
        return jnp.where(doq > 0.5, tq, t)

    x_q = fq_act(x)
    w = weight.astype(jnp.float32)
    w_scale = jnp.maximum(jnp.max(jnp.abs(w), axis=1, keepdims=True) / 127.0, 1e-8)
    w_q = jnp.clip(jnp.round(w / w_scale), -128.0, 127.0) * w_scale
    out = jnp.dot(x_q, w_q.T, precision=jax.lax.Precision.HIGHEST)
    out = out + bias.astype(jnp.float32)[None, :]
    out = fq_act(out)
    return out.reshape(B, S, V)


def _check(name, got, ref):
    got = np.asarray(got, dtype=np.float64)
    ref = np.asarray(ref, dtype=np.float64)
    assert got.shape == ref.shape, (name, got.shape, ref.shape)
    rng = float(ref.max() - ref.min())
    step = max(rng / 255.0, 1e-8)        # one act-out quant step
    diff = np.abs(got - ref)
    # Pre-quant logits from the kernel and the f32 reference may differ by a
    # few ulps (different f32 accumulation), which the act-out round() can
    # amplify to exactly one quant step on boundary-straddling elements.
    assert diff.max() <= 1.05 * step + 1e-6, (name, float(diff.max()), step)
    assert float((diff > 1e-5).mean()) <= 0.01, (name, float((diff > 1e-5).mean()))


if __name__ == "__main__":
    head = jax.jit(bit_bert_lm_prediction_head)

    # Case 1: aligned small config (batch=2, seq=8, hidden=32, vocab=256).
    key = jax.random.PRNGKey(0)
    k_x, k_w = jax.random.split(key)
    B, S, H, V = 2, 8, 32, 256
    hidden_states = jax.random.normal(k_x, (B, S, H), dtype=jnp.float32)
    weight = 0.02 * jax.random.normal(k_w, (V, H), dtype=jnp.float32)
    bias = jnp.zeros((V,), dtype=jnp.float32)
    logits = head(hidden_states, weight, bias)
    jax.block_until_ready(logits)
    assert logits.shape == (B, S, V)
    _check("aligned", logits, _reference(hidden_states, weight, bias))

    # Case 2: unaligned vocab / tokens exercises padding + masked observer.
    k_x2, k_w2, k_b2 = jax.random.split(jax.random.PRNGKey(0), 3)
    B2, S2, H2, V2 = 2, 7, 32, 250
    hs2 = jax.random.normal(k_x2, (B2, S2, H2), dtype=jnp.float32)
    w2 = 0.02 * jax.random.normal(k_w2, (V2, H2), dtype=jnp.float32)
    b2 = 0.01 * jax.random.normal(k_b2, (V2,), dtype=jnp.float32)
    logits2 = head(hs2, w2, b2)
    jax.block_until_ready(logits2)
    assert logits2.shape == (B2, S2, V2)
    _check("padded", logits2, _reference(hs2, w2, b2))

    print("KERNEL_OK")
</pallas_src>

<mosaic_0001>
module attributes {stable_mosaic.version = 11 : i64} {
  func.func @kernel(%arg0: i32, %arg1: i32, %arg2: memref<3xf32, #tpu.memory_space<smem>>, %arg3: memref<16x32xf32, #tpu.memory_space<vmem>>, %arg4: memref<128x32xf32, #tpu.memory_space<vmem>>, %arg5: memref<1x128xf32, #tpu.memory_space<vmem>>, %arg6: memref<16x128xf32, #tpu.memory_space<vmem>>, %arg7: memref<8x128xf32, #tpu.memory_space<vmem>>, %arg8: memref<8x128xf32, #tpu.memory_space<vmem>>, %arg9: memref<32x128xf32, #tpu.memory_space<vmem>>, %arg10: memref<1x128xf32, #tpu.memory_space<vmem>>, %arg11: memref<1x128xf32, #tpu.memory_space<vmem>>) attributes {dimension_semantics = [#tpu.dimension_semantics<parallel>, #tpu.dimension_semantics<arbitrary>], iteration_bounds = array<i64: 2, 1>, scalar_prefetch = 0 : i64, scratch_operands = 3 : i64, tpu.core_type = #tpu.core_type<tc>, window_params = [{transform_indices = @transform_0, window_bounds = array<i64: 3>}, {pipeline_mode = #tpu.pipeline_mode<synchronous>, transform_indices = @transform_1, window_bounds = array<i64: 16, 32>}, {transform_indices = @transform_2, window_bounds = array<i64: 128, 32>}, {transform_indices = @transform_3, window_bounds = array<i64: 1, 128>}, {transform_indices = @transform_4, window_bounds = array<i64: 16, 128>}, {transform_indices = @transform_5, window_bounds = array<i64: 8, 128>}, {transform_indices = @transform_6, window_bounds = array<i64: 8, 128>}]} {
    %c0_i32 = arith.constant 0 : i32
    %0 = arith.cmpi eq, %arg1, %c0_i32 : i32
    %1 = arith.extui %0 : i1 to i32
    %c0_i32_0 = arith.constant 0 : i32
    %2 = arith.cmpi ne, %1, %c0_i32_0 : i32
    scf.if %2 {
      %c0_23 = arith.constant 0 : index
      %c0_24 = arith.constant 0 : index
      %44 = vector.load %arg4[%c0_23, %c0_24] : memref<128x32xf32, #tpu.memory_space<vmem>>, vector<128x32xf32>
      %45 = tpu.transpose %44, [1, 0] : vector<128x32xf32> -> vector<32x128xf32>
      %46 = math.absf %45 : vector<32x128xf32>
      %cst_25 = arith.constant dense<0xFF800000> : vector<128xf32>
      %47 = vector.multi_reduction <maximumf>, %46, %cst_25 [0] : vector<32x128xf32> to vector<128xf32>
      %48 = vector.shape_cast %47 : vector<128xf32> to vector<1x128xf32>
      %cst_26 = arith.constant 1.270000e+02 : f32
      %49 = vector.broadcast %cst_26 : f32 to vector<1x128xf32>
      %50 = arith.divf %48, %49 : vector<1x128xf32>
      %cst_27 = arith.constant 9.99999993E-9 : f32
      %51 = vector.broadcast %cst_27 : f32 to vector<1x128xf32>
      %52 = arith.maximumf %50, %51 : vector<1x128xf32>
      %53 = vector.broadcast %52 : vector<1x128xf32> to vector<32x128xf32>
      %54 = arith.divf %45, %53 : vector<32x128xf32>
      %55 = math.roundeven %54 : vector<32x128xf32>
      %cst_28 = arith.constant -1.280000e+02 : f32
      %cst_29 = arith.constant 1.270000e+02 : f32
      %56 = vector.broadcast %cst_28 : f32 to vector<32x128xf32>
      %57 = arith.maximumf %56, %55 : vector<32x128xf32>
      %58 = vector.broadcast %cst_29 : f32 to vector<32x128xf32>
      %59 = arith.minimumf %58, %57 : vector<32x128xf32>
      %60 = vector.broadcast %52 : vector<1x128xf32> to vector<32x128xf32>
      %61 = arith.mulf %59, %60 : vector<32x128xf32>
      %c0_30 = arith.constant 0 : index
      %c0_31 = arith.constant 0 : index
      %62 = vector.load %arg9[%c0_30, %c0_31] : memref<32x128xf32, #tpu.memory_space<vmem>>, vector<32x128xf32>
      tpu.vector_store %arg9[%c0_30, %c0_31], %61 {strides = array<i32>} : memref<32x128xf32, #tpu.memory_space<vmem>>, vector<32x128xf32>,
      %cst_32 = arith.constant 0x7F800000 : f32
      %63 = vector.broadcast %cst_32 : f32 to vector<1x128xf32>
      %c0_33 = arith.constant 0 : index
      %c0_34 = arith.constant 0 : index
      %64 = vector.load %arg10[%c0_33, %c0_34] : memref<1x128xf32, #tpu.memory_space<vmem>>, vector<1x128xf32>
      tpu.vector_store %arg10[%c0_33, %c0_34], %63 {strides = array<i32>} : memref<1x128xf32, #tpu.memory_space<vmem>>, vector<1x128xf32>,
      %cst_35 = arith.constant 0xFF800000 : f32
      %65 = vector.broadcast %cst_35 : f32 to vector<1x128xf32>
      %c0_36 = arith.constant 0 : index
      %c0_37 = arith.constant 0 : index
      %66 = vector.load %arg11[%c0_36, %c0_37] : memref<1x128xf32, #tpu.memory_space<vmem>>, vector<1x128xf32>
      tpu.vector_store %arg11[%c0_36, %c0_37], %65 {strides = array<i32>} : memref<1x128xf32, #tpu.memory_space<vmem>>, vector<1x128xf32>,
    } else {
    }
    %c0 = arith.constant 0 : index
    %3 = memref.load %arg2[%c0] : memref<3xf32, #tpu.memory_space<smem>>
    %c1 = arith.constant 1 : index
    %4 = memref.load %arg2[%c1] : memref<3xf32, #tpu.memory_space<smem>>
    %c2 = arith.constant 2 : index
    %5 = memref.load %arg2[%c2] : memref<3xf32, #tpu.memory_space<smem>>
    %c16_i32 = arith.constant 16 : i32
    %6 = arith.muli %arg1, %c16_i32 : i32
    %7 = tpu.assume_multiple %6, 16 : i32
    %8 = arith.index_cast %7 : i32 to index
    %c0_1 = arith.constant 0 : index
    %9 = vector.load %arg3[%8, %c0_1] : memref<16x32xf32, #tpu.memory_space<vmem>>, vector<16x32xf32>
    %10 = vector.broadcast %3 : f32 to vector<16x32xf32>
    %11 = arith.divf %9, %10 : vector<16x32xf32>
    %12 = vector.broadcast %4 : f32 to vector<16x32xf32>
    %13 = arith.addf %11, %12 : vector<16x32xf32>
    %14 = math.roundeven %13 : vector<16x32xf32>
    %cst = arith.constant 0.000000e+00 : f32
    %cst_2 = arith.constant 2.550000e+02 : f32
    %15 = vector.broadcast %cst : f32 to vector<16x32xf32>
    %16 = arith.maximumf %15, %14 : vector<16x32xf32>
    %17 = vector.broadcast %cst_2 : f32 to vector<16x32xf32>
    %18 = arith.minimumf %17, %16 : vector<16x32xf32>
    %cst_3 = arith.constant 5.000000e-01 : f32
    %19 = arith.cmpf ogt, %5, %cst_3 : f32
    %20 = vector.broadcast %4 : f32 to vector<16x32xf32>
    %21 = arith.subf %18, %20 : vector<16x32xf32>
    %22 = vector.broadcast %3 : f32 to vector<16x32xf32>
    %23 = arith.mulf %21, %22 : vector<16x32xf32>
    %24 = arith.select %19, %23, %9 : vector<16x32xf32>
    %c0_4 = arith.constant 0 : index
    %c0_5 = arith.constant 0 : index
    %25 = vector.load %arg9[%c0_4, %c0_5] : memref<32x128xf32, #tpu.memory_space<vmem>>, vector<32x128xf32>
    %cst_6 = arith.constant dense<0.000000e+00> : vector<16x128xf32>
    %26 = tpu.matmul %24, %25, %cst_6 {dimension_numbers = #tpu.dot_dimension_numbers<[1], [0], [0], [1], [0, 0, 1, 1], [], []>} : vector<16x32xf32>, vector<32x128xf32>, vector<16x128xf32> -> vector<16x128xf32>
    %c0_7 = arith.constant 0 : index
    %c0_8 = arith.constant 0 : index
    %27 = vector.load %arg5[%c0_7, %c0_8] : memref<1x128xf32, #tpu.memory_space<vmem>>, vector<1x128xf32>
    %28 = vector.broadcast %27 : vector<1x128xf32> to vector<16x128xf32>
    %29 = arith.addf %26, %28 : vector<16x128xf32>
    %c0_9 = arith.constant 0 : index
    %c0_10 = arith.constant 0 : index
    %30 = vector.load %arg6[%c0_9, %c0_10] : memref<16x128xf32, #tpu.memory_space<vmem>>, vector<16x128xf32>
    tpu.vector_store %arg6[%c0_9, %c0_10], %29 {strides = array<i32>} : memref<16x128xf32, #tpu.memory_space<vmem>>, vector<16x128xf32>,
    %c0_11 = arith.constant 0 : index
    %c0_12 = arith.constant 0 : index
    %31 = vector.load %arg10[%c0_11, %c0_12] : memref<1x128xf32, #tpu.memory_space<vmem>>, vector<1x128xf32>
    %cst_13 = arith.constant dense<0x7F800000> : vector<128xf32>
    %32 = vector.multi_reduction <minimumf>, %29, %cst_13 [0] : vector<16x128xf32> to vector<128xf32>
    %33 = vector.shape_cast %32 : vector<128xf32> to vector<1x128xf32>
    %34 = arith.minimumf %31, %33 : vector<1x128xf32>
    %c0_14 = arith.constant 0 : index
    %c0_15 = arith.constant 0 : index
    %35 = vector.load %arg10[%c0_14, %c0_15] : memref<1x128xf32, #tpu.memory_space<vmem>>, vector<1x128xf32>
    tpu.vector_store %arg10[%c0_14, %c0_15], %34 {strides = array<i32>} : memref<1x128xf32, #tpu.memory_space<vmem>>, vector<1x128xf32>,
    %c0_16 = arith.constant 0 : index
    %c0_17 = arith.constant 0 : index
    %36 = vector.load %arg11[%c0_16, %c0_17] : memref<1x128xf32, #tpu.memory_space<vmem>>, vector<1x128xf32>
    %cst_18 = arith.constant dense<0xFF800000> : vector<128xf32>
    %37 = vector.multi_reduction <maximumf>, %29, %cst_18 [0] : vector<16x128xf32> to vector<128xf32>
    %38 = vector.shape_cast %37 : vector<128xf32> to vector<1x128xf32>
    %39 = arith.maximumf %36, %38 : vector<1x128xf32>
    %c0_19 = arith.constant 0 : index
    %c0_20 = arith.constant 0 : index
    %40 = vector.load %arg11[%c0_19, %c0_20] : memref<1x128xf32, #tpu.memory_space<vmem>>, vector<1x128xf32>
    tpu.vector_store %arg11[%c0_19, %c0_20], %39 {strides = array<i32>} : memref<1x128xf32, #tpu.memory_space<vmem>>, vector<1x128xf32>,
    %c0_i32_21 = arith.constant 0 : i32
    %41 = arith.cmpi eq, %arg1, %c0_i32_21 : i32
    %42 = arith.extui %41 : i1 to i32
    %c0_i32_22 = arith.constant 0 : i32
    %43 = arith.cmpi ne, %42, %c0_i32_22 : i32
    scf.if %43 {
      %c0_23 = arith.constant 0 : index
      %c0_24 = arith.constant 0 : index
      %44 = vector.load %arg10[%c0_23, %c0_24] : memref<1x128xf32, #tpu.memory_space<vmem>>, vector<1x128xf32>
      %cst_25 = arith.constant dense<0x7F800000> : vector<1xf32>
      %45 = vector.multi_reduction <minimumf>, %44, %cst_25 [1] : vector<1x128xf32> to vector<1xf32>
      %46 = vector.shape_cast %45 : vector<1xf32> to vector<1x1xf32>
      %c0_26 = arith.constant 0 : index
      %c0_27 = arith.constant 0 : index
      %47 = vector.load %arg11[%c0_26, %c0_27] : memref<1x128xf32, #tpu.memory_space<vmem>>, vector<1x128xf32>
      %cst_28 = arith.constant dense<0xFF800000> : vector<1xf32>
      %48 = vector.multi_reduction <maximumf>, %47, %cst_28 [1] : vector<1x128xf32> to vector<1xf32>
      %49 = vector.shape_cast %48 : vector<1xf32> to vector<1x1xf32>
      %50 = vector.shape_cast %46 : vector<1x1xf32> to vector<1x1xf32>
      %51 = vector.broadcast %50 : vector<1x1xf32> to vector<8x128xf32>
      %c0_29 = arith.constant 0 : index
      %c0_30 = arith.constant 0 : index
      %52 = vector.load %arg7[%c0_29, %c0_30] : memref<8x128xf32, #tpu.memory_space<vmem>>, vector<8x128xf32>
      tpu.vector_store %arg7[%c0_29, %c0_30], %51 {strides = array<i32>} : memref<8x128xf32, #tpu.memory_space<vmem>>, vector<8x128xf32>,
      %53 = vector.shape_cast %49 : vector<1x1xf32> to vector<1x1xf32>
      %54 = vector.broadcast %53 : vector<1x1xf32> to vector<8x128xf32>
      %c0_31 = arith.constant 0 : index
      %c0_32 = arith.constant 0 : index
      %55 = vector.load %arg8[%c0_31, %c0_32] : memref<8x128xf32, #tpu.memory_space<vmem>>, vector<8x128xf32>
      tpu.vector_store %arg8[%c0_31, %c0_32], %54 {strides = array<i32>} : memref<8x128xf32, #tpu.memory_space<vmem>>, vector<8x128xf32>,
    } else {
    }
    return
  }
  func.func @transform_0(%arg0: i32, %arg1: i32) -> i32 {
    %c0_i32 = arith.constant 0 : i32
    %c0_i32_0 = arith.constant 0 : i32
    return %c0_i32 : i32
  }
  func.func @transform_1(%arg0: i32, %arg1: i32) -> (i32, i32) {
    %c0_i32 = arith.constant 0 : i32
    %c0_i32_0 = arith.constant 0 : i32
    %c0_i32_1 = arith.constant 0 : i32
    return %c0_i32, %c0_i32_0 : i32, i32
  }
  func.func @transform_2(%arg0: i32, %arg1: i32) -> (i32, i32) {
    %c0_i32 = arith.constant 0 : i32
    %c0_i32_0 = arith.constant 0 : i32
    return %arg0, %c0_i32 : i32, i32
  }
  func.func @transform_3(%arg0: i32, %arg1: i32) -> (i32, i32) {
    %c0_i32 = arith.constant 0 : i32
    %c0_i32_0 = arith.constant 0 : i32
    return %c0_i32, %arg0 : i32, i32
  }
  func.func @transform_4(%arg0: i32, %arg1: i32) -> (i32, i32) {
    %c0_i32 = arith.constant 0 : i32
    return %arg1, %arg0 : i32, i32
  }
  func.func @transform_5(%arg0: i32, %arg1: i32) -> (i32, i32) {
    %c0_i32 = arith.constant 0 : i32
    %c0_i32_0 = arith.constant 0 : i32
    return %arg0, %c0_i32 : i32, i32
  }
  func.func @transform_6(%arg0: i32, %arg1: i32) -> (i32, i32) {
    %c0_i32 = arith.constant 0 : i32
    %c0_i32_0 = arith.constant 0 : i32
    return %arg0, %c0_i32 : i32, i32
  }
}

module attributes {stable_mosaic.version = 11 : i64} {
  func.func @_act_out_quant_kernel(%arg0: i32, %arg1: i32, %arg2: memref<3xf32, #tpu.memory_space<smem>>, %arg3: memref<16x256xf32, #tpu.memory_space<vmem>>, %arg4: memref<16x256xf32, #tpu.memory_space<vmem>>) attributes {dimension_semantics = [#tpu.dimension_semantics<parallel>, #tpu.dimension_semantics<parallel>], iteration_bounds = array<i64: 1, 1>, scalar_prefetch = 0 : i64, scratch_operands = 0 : i64, tpu.core_type = #tpu.core_type<tc>, window_params = [{transform_indices = @transform_0, window_bounds = array<i64: 3>}, {transform_indices = @transform_1, window_bounds = array<i64: 16, 256>}, {transform_indices = @transform_2, window_bounds = array<i64: 16, 256>}]} {
    %c0 = arith.constant 0 : index
    %0 = memref.load %arg2[%c0] : memref<3xf32, #tpu.memory_space<smem>>
    %c1 = arith.constant 1 : index
    %1 = memref.load %arg2[%c1] : memref<3xf32, #tpu.memory_space<smem>>
    %c2 = arith.constant 2 : index
    %2 = memref.load %arg2[%c2] : memref<3xf32, #tpu.memory_space<smem>>
    %c0_0 = arith.constant 0 : index
    %c0_1 = arith.constant 0 : index
    %3 = vector.load %arg3[%c0_0, %c0_1] : memref<16x256xf32, #tpu.memory_space<vmem>>, vector<16x256xf32>
    %4 = vector.broadcast %0 : f32 to vector<16x256xf32>
    %5 = arith.divf %3, %4 : vector<16x256xf32>
    %6 = vector.broadcast %1 : f32 to vector<16x256xf32>
    %7 = arith.addf %5, %6 : vector<16x256xf32>
    %8 = math.roundeven %7 : vector<16x256xf32>
    %cst = arith.constant 0.000000e+00 : f32
    %cst_2 = arith.constant 2.550000e+02 : f32
    %9 = vector.broadcast %cst : f32 to vector<16x256xf32>
    %10 = arith.maximumf %9, %8 : vector<16x256xf32>
    %11 = vector.broadcast %cst_2 : f32 to vector<16x256xf32>
    %12 = arith.minimumf %11, %10 : vector<16x256xf32>
    %cst_3 = arith.constant 5.000000e-01 : f32
    %13 = arith.cmpf ogt, %2, %cst_3 : f32
    %14 = vector.broadcast %1 : f32 to vector<16x256xf32>
    %15 = arith.subf %12, %14 : vector<16x256xf32>
    %16 = vector.broadcast %0 : f32 to vector<16x256xf32>
    %17 = arith.mulf %15, %16 : vector<16x256xf32>
    %18 = arith.select %13, %17, %3 : vector<16x256xf32>
    %c0_4 = arith.constant 0 : index
    %c0_5 = arith.constant 0 : index
    %19 = vector.load %arg4[%c0_4, %c0_5] : memref<16x256xf32, #tpu.memory_space<vmem>>, vector<16x256xf32>
    tpu.vector_store %arg4[%c0_4, %c0_5], %18 {strides = array<i32>} : memref<16x256xf32, #tpu.memory_space<vmem>>, vector<16x256xf32>,
    return
  }
  func.func @transform_0(%arg0: i32, %arg1: i32) -> i32 {
    %c0_i32 = arith.constant 0 : i32
    %c0_i32_0 = arith.constant 0 : i32
    return %c0_i32 : i32
  }
  func.func @transform_1(%arg0: i32, %arg1: i32) -> (i32, i32) {
    %c0_i32 = arith.constant 0 : i32
    return %arg0, %arg1 : i32, i32
  }
  func.func @transform_2(%arg0: i32, %arg1: i32) -> (i32, i32) {
    %c0_i32 = arith.constant 0 : i32
    return %arg0, %arg1 : i32, i32
  }
}

</mosaic_0001>

<llo_original>
// kernel: bit_bert_lm_prediction_head.3
$region0: #{bit_bert_lm_prediction_head.3}
  #allocation0 [shape = 'u32[]', space=smem, size = 0x4, offset = 0x4, fixed_abs, tag = 'smem constant byte address 0x4 - core index']
  #allocation1 [shape = 'u32[144,128]{1,0:T(1,128)}', space=vmem, size = 0x12000, scoped, tag = 'internal scratch']
  %s0 = inlined_call_operand.vmem [shape: f32[3], index: 0, kind: input, shape index: {}]
  %s1 = inlined_call_operand.vmem [shape: f32[16,256], index: 1, kind: input, shape index: {}, may-alias: {1,2}]
  %s2 = inlined_call_operand.vmem [shape: f32[16,256], index: 2, kind: output, shape index: {}, may-alias: {1,2}]
  %s3 = sld [smem:[#allocation0]]
  $region22: #{bit_bert_lm_prediction_head.3} parent=0
    _
  %s5 = ssub.s32 1, %s3
  %s6 = scalar_select 0, %s5, %s3
  $region1: #{bit_bert_lm_prediction_head.3} parent=0
    #allocation2 [shape = 'u8[512]{0}', space=smem, size = 0x200, scoped, tag = 'input window, operand 0, single buffered']
    #allocation3 [shape = 's32[1]{0}', space=sflag, size = 0x4, scoped, tag = 'scoped memory for bit_bert_lm_prediction_head.3']
    %7 = vsyncpa [#allocation3], 0
    // Predicated region
    $region2: #{bit_bert_lm_prediction_head.3} parent=1 // pred_check
      _
    $region3: #{bit_bert_lm_prediction_head.3} parent=1 // pred_check_branch
      %9 = sbr.rel (0) target = $region5
    $region4: #{bit_bert_lm_prediction_head.3} parent=1 // pred_region
      %s11 = ssub.s32 16, 16
      %12 = vsyncadd [#allocation3], %s11
      %s14 = sshll.u32 %s0, 4
      %s15 = int_to_ptr.vmem [resolvable:$true] %s14
      %17 = dma.vmem_to_smem %s15, 16, [#allocation2], [#allocation3]
    $region5: #{bit_bert_lm_prediction_head.3} parent=1 // pred_fallthru
      _
    // Predicated region
    $region6: #{bit_bert_lm_prediction_head.3} parent=1 // pred_check
      _
    $region7: #{bit_bert_lm_prediction_head.3} parent=1 // pred_check_branch
      %19 = sbr.rel (0) target = $region9
    $region8: #{bit_bert_lm_prediction_head.3} parent=1 // pred_region
      _
    $region9: #{bit_bert_lm_prediction_head.3} parent=1 // pred_fallthru
      _
    // Predicated region
    $region10: #{bit_bert_lm_prediction_head.3} parent=1 // pred_check
      _
    $region11: #{bit_bert_lm_prediction_head.3} parent=1 // pred_check_branch
      %21 = sbr.rel (0) target = $region13
    $region12: #{bit_bert_lm_prediction_head.3} parent=1 // pred_region
      %22 = dma.done [#allocation3], 16
    $region13: #{bit_bert_lm_prediction_head.3} parent=1 // pred_fallthru
      _
    %23 = sfence
    %s24 = sld [smem:[#allocation2]]
    %s25 = sld [smem:[#allocation2 + $0x1]]
    %s26 = sld [smem:[#allocation2 + $0x2]]
    %v27 = vld [vmem:[%s1] sm:$0xff]
    %v28 = vld [vmem:[%s1 + $0x8] sm:$0xff]
    %v29 = vld [vmem:[%s1 + $0x10] sm:$0xff]
    %v30 = vld [vmem:[%s1 + $0x18] sm:$0xff]
    %v31 = vstv %s24
    %v32 = vrcp.pop %v31
    %v33 = vmul.f32 %v27, %v32
    %v34 = vmul.f32 %v28, %v32
    %v35 = vmul.f32 %v29, %v32
    %v36 = vmul.f32 %v30, %v32
    %v37 = vstv %s25
    %v38 = vadd.f32 %v33, %v37
    %v39 = vadd.f32 %v34, %v37
    %v40 = vadd.f32 %v35, %v37
    %v41 = vadd.f32 %v36, %v37
    %v42 = vround.ne.pseudo %v38
    %v43 = vround.ne.pseudo %v39
    %v44 = vround.ne.pseudo %v40
    %v45 = vround.ne.pseudo %v41
    %v46 = vmax.f32 %v42, 0.0
    %v47 = vmax.f32 %v43, 0.0
    %v48 = vmax.f32 %v44, 0.0
    %v49 = vmax.f32 %v45, 0.0
    %v50 = vmin.f32 %v46, 255.0
    %v51 = vmin.f32 %v47, 255.0
    %v52 = vmin.f32 %v48, 255.0
    %v53 = vmin.f32 %v49, 255.0
    %p54 = scmp.gt.f32.partialorder %s26, 0.5
    %v55 = vsub.f32 %v50, %v37
    %v56 = vsub.f32 %v51, %v37
    %v57 = vsub.f32 %v52, %v37
    %v58 = vsub.f32 %v53, %v37
    %v59 = vmul.f32 %v55, %v31
    %v60 = vmul.f32 %v56, %v31
    %v61 = vmul.f32 %v57, %v31
    %v62 = vmul.f32 %v58, %v31
    %s63 = scalar_select %p54, 1, 0
    %v64 = vstv %s63
    %vm65 = vcmp.eq.s32.totalorder %v64, 1
    %v66 = vsel %vm65, %v59, %v27
    %v67 = vsel %vm65, %v60, %v28
    %v68 = vsel %vm65, %v61, %v29
    %v69 = vsel %vm65, %v62, %v30
    %70 = vst [vmem:[%s2] sm:$0xff] %v66
    %71 = vst [vmem:[%s2 + $0x8] sm:$0xff] %v67
    %72 = vst [vmem:[%s2 + $0x10] sm:$0xff] %v68
    %73 = vst [vmem:[%s2 + $0x18] sm:$0xff] %v69
    // Predicated region
    $region14: #{bit_bert_lm_prediction_head.3} parent=1 // pred_check
      _
    $region15: #{bit_bert_lm_prediction_head.3} parent=1 // pred_check_branch
      %75 = sbr.rel (0) target = $region17
    $region16: #{bit_bert_lm_prediction_head.3} parent=1 // pred_region
      _
    $region17: #{bit_bert_lm_prediction_head.3} parent=1 // pred_fallthru
      _
    // Predicated region
    $region18: #{bit_bert_lm_prediction_head.3} parent=1 // pred_check
      _
    $region19: #{bit_bert_lm_prediction_head.3} parent=1 // pred_check_branch
      %77 = sbr.rel (0) target = $region21
    $region20: #{bit_bert_lm_prediction_head.3} parent=1 // pred_region
      _
    $region21: #{bit_bert_lm_prediction_head.3} parent=1 // pred_fallthru
      _
    %78 = vsyncpa [#allocation3], 1

// kernel: bit_bert_lm_prediction_head.2
$region0: #{bit_bert_lm_prediction_head.2}
  #allocation0 [shape = 'u32[]', space=smem, size = 0x4, offset = 0x4, fixed_abs, tag = 'smem constant byte address 0x4 - core index']
  #allocation1 [shape = 'u32[144,128]{1,0:T(1,128)}', space=vmem, size = 0x12000, scoped, tag = 'internal scratch']
  #allocation2 [shape = 'f32[32,128]{1,0:T(8,128)}', space=vmem, size = 0x4000, scoped, tag = 'scratch operand']
  #allocation3 [shape = 'f32[1,128]{1,0:T(1,128)}', space=vmem, size = 0x200, scoped, tag = 'scratch operand']
  #allocation4 [shape = 'f32[1,128]{1,0:T(1,128)}', space=vmem, size = 0x200, scoped, tag = 'scratch operand']
  %s0 = inlined_call_operand.vmem [shape: f32[3], index: 0, kind: input, shape index: {}]
  %s1 = inlined_call_operand.vmem [shape: f32[16,32], index: 1, kind: input, shape index: {}]
  %s2 = inlined_call_operand.vmem [shape: f32[256,32], index: 2, kind: input, shape index: {}]
  %s3 = inlined_call_operand.vmem [shape: f32[1,256], index: 3, kind: input, shape index: {}]
  %s4 = inlined_call_operand.vmem [shape: f32[16,256], index: 4, kind: output, shape index: {0}]
  %s5 = inlined_call_operand.vmem [shape: f32[16,128], index: 5, kind: output, shape index: {1}]
  %s6 = inlined_call_operand.vmem [shape: f32[16,128], index: 6, kind: output, shape index: {2}]
  %7 = xla_tuple %s4, %s5, %s6
  %s8 = sld [smem:[#allocation0]]
  $region111: #{bit_bert_lm_prediction_head.2} parent=0
    _
  %s10 = ssub.s32 1, %s8
  %s11 = scalar_select 0, %s10, %s8
  $region1: #{bit_bert_lm_prediction_head.2} parent=0
    #allocation5 [shape = 'u8[512]{0}', space=smem, size = 0x200, scoped, tag = 'input window, operand 0, single buffered']
    #allocation6 [shape = 's32[2]{0}', space=sflag, size = 0x8, scoped, tag = 'scoped memory for bit_bert_lm_prediction_head.2']
    #allocation7 [shape = 'u8[16384]{0}', space=vmem, size = 0x4000, scoped, tag = 'output window, operand 0']
    %12 = vsyncpa [#allocation6], 0
    loop: start=0, step=1, limit=4
    $region2: #{bit_bert_lm_prediction_head.2} parent=1 // loop_pre_header
      _
    $region3: #{bit_bert_lm_prediction_head.2} parent=1 // loop_header
      %s14 = sphi 0, %s18
      %p15 = scmp.ge.s32.totalorder %s14, 4
      %s21 = sphi 0, %s33
      %s22 = sphi 0, %s29
      %s23 = sphi 0, %s21
      %s24 = sphi 0, %s22
      %s25 = sphi 0, %s23
      %s26 = sphi 0, %s24
      %s34 = sphi 0, %s34
      %s36 = sphi 0, %s34
      %s37 = sphi 0, %s36
      %s51 = sphi 0, %s37
      %s55 = sphi 0, %s55
      %s57 = sphi 0, %s55
      %s58 = sphi 0, %s57
      %s72 = sphi 0, %s58
      %s78 = sphi 0, %s80
      %s81 = sphi 0, %s78
      %s82 = sphi 0, %s81
      %s98 = sphi 0, %s82
      %s104 = sphi 0, %s106
      %s107 = sphi 0, %s104
      %s108 = sphi 0, %s107
      %s124 = sphi 0, %s108
      %s132 = sphi 0, %s134
      %s135 = sphi 0, %s132
      %s136 = sphi 0, %s135
      %s152 = sphi 0, %s136
      %s158 = sphi 0, %s160
      %s161 = sphi 0, %s158
      %s162 = sphi 0, %s161
      %s178 = sphi 0, %s162
      %s184 = sphi 0, %s186
      %s187 = sphi 0, %s184
      %s188 = sphi 0, %s187
      %s204 = sphi 0, %s188
    $region4: #{bit_bert_lm_prediction_head.2} parent=1 // loop_header_branch
      %17 = sbr.rel (%p15) target = $region8
    $region5: #{bit_bert_lm_prediction_head.2} parent=1 // loop_body
      %s19 = ssub.s32 %s14, 1
      %s20 = ssub.s32 %s14, 2
      %s27 = sadd.s32 1, %s22
      %p28 = scmp.ge.s32.totalorder %s27, 1
      %s29 = scalar_select %p28, 0, %s27
      %s30 = sadd.s32 1, %s21
      %s31 = scalar_select %p28, %s30, %s21
      %p32 = scmp.ge.s32.totalorder %s31, 2
      %s33 = scalar_select %p32, 0, %s31
      %s35 = sadd.s32 %s34, 1
      %p38 = scmp.eq.s32.totalorder %s14, 1
      %p39 = scmp.ne.s32.totalorder %s34, %s36
      %p40 = scmp.eq.s32.totalorder %s14, 0
      %p41 = por %p39, %p40
      %p42 = scmp.ne.s32.totalorder %s34, %s36
      %p43 = scmp.eq.s32.totalorder %s19, 1
      %p44 = por %p42, %p43
      %p45 = scmp.ne.s32.totalorder %s36, %s37
      %p46 = scmp.eq.s32.totalorder %s19, 0
      %p47 = por %p45, %p46
      %p48 = scmp.ne.s32.totalorder %s36, %s37
      %p49 = scmp.eq.s32.totalorder %s20, 1
      %p50 = por %p48, %p49
      %p52 = scmp.ne.s32.totalorder %s37, %s51
      %p53 = scmp.eq.s32.totalorder %s20, 0
      %p54 = por %p52, %p53
      %s56 = sadd.s32 %s55, 1
      %p59 = scmp.eq.s32.totalorder %s14, 1
      %p60 = scmp.ne.s32.totalorder %s55, %s57
      %p61 = scmp.eq.s32.totalorder %s14, 0
      %p62 = por %p60, %p61
      %p63 = scmp.ne.s32.totalorder %s55, %s57
      %p64 = scmp.eq.s32.totalorder %s19, 1
      %p65 = por %p63, %p64
      %p66 = scmp.ne.s32.totalorder %s57, %s58
      %p67 = scmp.eq.s32.totalorder %s19, 0
      %p68 = por %p66, %p67
      %p69 = scmp.ne.s32.totalorder %s57, %s58
      %p70 = scmp.eq.s32.totalorder %s20, 1
      %p71 = por %p69, %p70
      %p73 = scmp.ne.s32.totalorder %s58, %s72
      %p74 = scmp.eq.s32.totalorder %s20, 0
      %p75 = por %p73, %p74
      %s76 = ssub.s32 %s21, %s33
      %p77 = scmp.eq.s32.totalorder %s76, 0
      %s79 = sadd.s32 %s78, 1
      %s80 = scalar_select %p77, %s78, %s79
      %p83 = pneg %p77
      %p84 = scmp.eq.s32.totalorder %s14, 1
      %p85 = por %p83, %p84
      %p86 = scmp.ne.s32.totalorder %s78, %s81
      %p87 = scmp.eq.s32.totalorder %s14, 0
      %p88 = por %p86, %p87
      %p89 = scmp.ne.s32.totalorder %s78, %s81
      %p90 = scmp.eq.s32.totalorder %s19, 1
      %p91 = por %p89, %p90
      %p92 = scmp.ne.s32.totalorder %s81, %s82
      %p93 = scmp.eq.s32.totalorder %s19, 0
      %p94 = por %p92, %p93
      %p95 = scmp.ne.s32.totalorder %s81, %s82
      %p96 = scmp.eq.s32.totalorder %s20, 1
      %p97 = por %p95, %p96
      %p99 = scmp.ne.s32.totalorder %s82, %s98
      %p100 = scmp.eq.s32.totalorder %s20, 0
      %p101 = por %p99, %p100
      %s102 = ssub.s32 %s21, %s33
      %p103 = scmp.eq.s32.totalorder %s102, 0
      %s105 = sadd.s32 %s104, 1
      %s106 = scalar_select %p103, %s104, %s105
      %p109 = pneg %p103
      %p110 = scmp.eq.s32.totalorder %s14, 1
      %p111 = por %p109, %p110
      %p112 = scmp.ne.s32.totalorder %s104, %s107
      %p113 = scmp.eq.s32.totalorder %s14, 0
      %p114 = por %p112, %p113
      %p115 = scmp.ne.s32.totalorder %s104, %s107
      %p116 = scmp.eq.s32.totalorder %s19, 1
      %p117 = por %p115, %p116
      %p118 = scmp.ne.s32.totalorder %s107, %s108
      %p119 = scmp.eq.s32.totalorder %s19, 0
      %p120 = por %p118, %p119
      %p121 = scmp.ne.s32.totalorder %s107, %s108
      %p122 = scmp.eq.s32.totalorder %s20, 1
      %p123 = por %p121, %p122
      %p125 = scmp.ne.s32.totalorder %s108, %s124
      %p126 = scmp.eq.s32.totalorder %s20, 0
      %p127 = por %p125, %p126
      %s128 = ssub.s32 %s22, %s29
      %s129 = ssub.s32 %s21, %s33
      %s130 = sor.u32 %s128, %s129
      %p131 = scmp.eq.s32.totalorder %s130, 0
      %s133 = sadd.s32 %s132, 1
      %s134 = scalar_select %p131, %s132, %s133
      %p137 = pneg %p131
      %p138 = scmp.eq.s32.totalorder %s14, 1
      %p139 = por %p137, %p138
      %p140 = scmp.ne.s32.totalorder %s132, %s135
      %p141 = scmp.eq.s32.totalorder %s14, 0
      %p142 = por %p140, %p141
      %p143 = scmp.ne.s32.totalorder %s132, %s135
      %p144 = scmp.eq.s32.totalorder %s19, 1
      %p145 = por %p143, %p144
      %p146 = scmp.ne.s32.totalorder %s135, %s136
      %p147 = scmp.eq.s32.totalorder %s19, 0
      %p148 = por %p146, %p147
      %p149 = scmp.ne.s32.totalorder %s135, %s136
      %p150 = scmp.eq.s32.totalorder %s20, 1
      %p151 = por %p149, %p150
      %p153 = scmp.ne.s32.totalorder %s136, %s152
      %p154 = scmp.eq.s32.totalorder %s20, 0
      %p155 = por %p153, %p154
      %s156 = ssub.s32 %s21, %s33
      %p157 = scmp.eq.s32.totalorder %s156, 0
      %s159 = sadd.s32 %s158, 1
      %s160 = scalar_select %p157, %s158, %s159
      %p163 = pneg %p157
      %p164 = scmp.eq.s32.totalorder %s14, 1
      %p165 = por %p163, %p164
      %p166 = scmp.ne.s32.totalorder %s158, %s161
      %p167 = scmp.eq.s32.totalorder %s14, 0
      %p168 = por %p166, %p167
      %p169 = scmp.ne.s32.totalorder %s158, %s161
      %p170 = scmp.eq.s32.totalorder %s19, 1
      %p171 = por %p169, %p170
      %p172 = scmp.ne.s32.totalorder %s161, %s162
      %p173 = scmp.eq.s32.totalorder %s19, 0
      %p174 = por %p172, %p173
      %p175 = scmp.ne.s32.totalorder %s161, %s162
      %p176 = scmp.eq.s32.totalorder %s20, 1
      %p177 = por %p175, %p176
      %p179 = scmp.ne.s32.totalorder %s162, %s178
      %p180 = scmp.eq.s32.totalorder %s20, 0
      %p181 = por %p179, %p180
      %s182 = ssub.s32 %s21, %s33
      %p183 = scmp.eq.s32.totalorder %s182, 0
      %s185 = sadd.s32 %s184, 1
      %s186 = scalar_select %p183, %s184, %s185
      %p189 = pneg %p183
      %p190 = scmp.eq.s32.totalorder %s14, 1
      %p191 = por %p189, %p190
      %p192 = scmp.ne.s32.totalorder %s184, %s187
      %p193 = scmp.eq.s32.totalorder %s14, 0
      %p194 = por %p192, %p193
      %p195 = scmp.ne.s32.totalorder %s184, %s187
      %p196 = scmp.eq.s32.totalorder %s19, 1
      %p197 = por %p195, %p196
      %p198 = scmp.ne.s32.totalorder %s187, %s188
      %p199 = scmp.eq.s32.totalorder %s19, 0
      %p200 = por %p198, %p199
      %p201 = scmp.ne.s32.totalorder %s187, %s188
      %p202 = scmp.eq.s32.totalorder %s20, 1
      %p203 = por %p201, %p202
      %p205 = scmp.ne.s32.totalorder %s188, %s204
      %p206 = scmp.eq.s32.totalorder %s20, 0
      %p207 = por %p205, %p206
      %p208 = scmp.le.s32.totalorder 1, %s14
      %p209 = scmp.lt.s32.totalorder %s14, 3
      %p210 = pnand %p208, %p209
      %p211 = pneg %p210
      // Predicated region
      $region9: #{bit_bert_lm_prediction_head.2} parent=5 // pred_check
        _
      $region10: #{bit_bert_lm_prediction_head.2} parent=5 // pred_check_branch
        %213 = sbr.rel (%p210) target = $region12
      $region11: #{bit_bert_lm_prediction_head.2} parent=5 // pred_region
        %s214 = ssub.s32 %s14, 1
        // Predicated region
        $region13: #{bit_bert_lm_prediction_head.2} parent=11 // pred_check
          %p215 = pneg %p47
        $region14: #{bit_bert_lm_prediction_head.2} parent=11 // pred_check_branch
          %217 = sbr.rel (%p215) target = $region16
        $region15: #{bit_bert_lm_prediction_head.2} parent=11 // pred_region
          %s219 = ssub.s32 16, 16
          %220 = vsyncadd [#allocation6], %s219
          %s222 = sshll.u32 %s0, 4
          %s223 = int_to_ptr.vmem [resolvable:$true] %s222
          %225 = dma.vmem_to_smem %s223, 16, [#allocation5], [#allocation6]
        $region16: #{bit_bert_lm_prediction_head.2} parent=11 // pred_fallthru
          _
        // Predicated region
        $region17: #{bit_bert_lm_prediction_head.2} parent=11 // pred_check
          %p226 = pneg %p68
        $region18: #{bit_bert_lm_prediction_head.2} parent=11 // pred_check_branch
          %228 = sbr.rel (%p226) target = $region20
        $region19: #{bit_bert_lm_prediction_head.2} parent=11 // pred_region
          _
        $region20: #{bit_bert_lm_prediction_head.2} parent=11 // pred_fallthru
          _
      $region12: #{bit_bert_lm_prediction_head.2} parent=5 // pred_fallthru
        _
      %p229 = scmp.lt.s32.totalorder %s14, 2
      // Predicated region
      $region21: #{bit_bert_lm_prediction_head.2} parent=5 // pred_check
        %p230 = pneg %p229
      $region22: #{bit_bert_lm_prediction_head.2} parent=5 // pred_check_branch
        %232 = sbr.rel (%p230) target = $region24
      $region23: #{bit_bert_lm_prediction_head.2} parent=5 // pred_region
        // Predicated region
        $region25: #{bit_bert_lm_prediction_head.2} parent=23 // pred_check
          %p233 = pneg %p88
        $region26: #{bit_bert_lm_prediction_head.2} parent=23 // pred_check_branch
          %235 = sbr.rel (%p233) target = $region28
        $region27: #{bit_bert_lm_prediction_head.2} parent=23 // pred_region
          %s236 = smul.u32 16, %s21
          %p237 = scmp.lt.s32.totalorder %s236, 31
          %s238 = scalar_select %p237, %s236, 31
          %s239 = smul.addr %s238, 8
          %s240 = scalar_lea.vmem %s2, %s239
          %s241 = smul.u32 16, %s21
        $region28: #{bit_bert_lm_prediction_head.2} parent=23 // pred_fallthru
          _
        // Predicated region
        $region29: #{bit_bert_lm_prediction_head.2} parent=23 // pred_check
          %p242 = pneg %p114
        $region30: #{bit_bert_lm_prediction_head.2} parent=23 // pred_check_branch
          %244 = sbr.rel (%p242) target = $region32
        $region31: #{bit_bert_lm_prediction_head.2} parent=23 // pred_region
          %p245 = scmp.lt.s32.totalorder %s21, 1
          %s246 = scalar_select %p245, %s21, 1
          %s247 = scalar_lea.vmem %s3, %s246
        $region32: #{bit_bert_lm_prediction_head.2} parent=23 // pred_fallthru
          _
      $region24: #{bit_bert_lm_prediction_head.2} parent=5 // pred_fallthru
        _
      %p248 = scmp.le.s32.totalorder 1, %s14
      %p249 = scmp.lt.s32.totalorder %s14, 3
      %p250 = pnand %p248, %p249
      %p251 = pneg %p250
      // Predicated region
      $region33: #{bit_bert_lm_prediction_head.2} parent=5 // pred_check
        _
      $region34: #{bit_bert_lm_prediction_head.2} parent=5 // pred_check_branch
        %253 = sbr.rel (%p250) target = $region36
      $region35: #{bit_bert_lm_prediction_head.2} parent=5 // pred_region
        %s254 = ssub.s32 %s14, 1
        // Predicated region
        $region37: #{bit_bert_lm_prediction_head.2} parent=35 // pred_check
          %p255 = pneg %p47
        $region38: #{bit_bert_lm_prediction_head.2} parent=35 // pred_check_branch
          %257 = sbr.rel (%p255) target = $region40
        $region39: #{bit_bert_lm_prediction_head.2} parent=35 // pred_region
          %258 = dma.done [#allocation6], 16
        $region40: #{bit_bert_lm_prediction_head.2} parent=35 // pred_fallthru
          _
        %259 = sfence
        %p260 = pneg %p47
        %p261 = pneg %p44
        %p262 = pneg %p68
        %p263 = pneg %p65
        %s264 = smul.u32 16, %s23
        %p265 = scmp.lt.s32.totalorder %s264, 31
        %s266 = scalar_select %p265, %s264, 31
        %s267 = smul.addr %s266, 8
        %s268 = scalar_lea.vmem %s2, %s267
        %p269 = pneg %p94
        %p270 = pneg %p91
        %p271 = scmp.lt.s32.totalorder %s23, 1
        %s272 = scalar_select %p271, %s23, 1
        %s273 = scalar_lea.vmem %s3, %s272
        %p274 = pneg %p120
        %p275 = pneg %p117
        %p276 = pneg %p148
        %p277 = pneg %p145
        %s278 = sand.u32 %s135, 1
        %s279 = sand.u32 %s135, 1
        %s280 = smul.addr %s279, 16
        %s281 = scalar_lea.vmem [#allocation7], %s280
        %p282 = pneg %p174
        %p283 = pneg %p171
        %p284 = scmp.lt.s32.totalorder %s23, 1
        %s285 = scalar_select %p284, %s23, 1
        %s286 = smul.addr %s285, 8
        %s287 = scalar_lea.vmem %s5, %s286
        %p288 = pneg %p200
        %p289 = pneg %p197
        %p290 = scmp.lt.s32.totalorder %s23, 1
        %s291 = scalar_select %p290, %s23, 1
        %s292 = smul.addr %s291, 8
        %s293 = scalar_lea.vmem %s6, %s292
        %s294 = smul.u32 16, %s23
        %p295 = scmp.lt.s32.totalorder %s294, 31
        %s296 = scalar_select %p295, %s294, 31
        %s297 = smul.addr %s296, 8
        %s298 = scalar_lea.vmem %s2, %s297
        %s299 = smul.u32 16, %s23
        %p300 = scmp.lt.s32.totalorder %s23, 1
        %s301 = scalar_select %p300, %s23, 1
        %s302 = scalar_lea.vmem %s3, %s301
        %s303 = smul.u32 2, %s24
        %p304 = scmp.lt.s32.totalorder %s23, 1
        %s305 = scalar_select %p304, %s23, 1
        %s306 = smul.addr %s305, 8
        %s307 = scalar_lea.vmem %s5, %s306
        %p308 = scmp.lt.s32.totalorder %s23, 1
        %s309 = scalar_select %p308, %s23, 1
        %s310 = smul.addr %s309, 8
        %s311 = scalar_lea.vmem %s6, %s310
        %p312 = scmp.eq.s32.totalorder %s24, 0
        // Predicated region
        $region41: #{bit_bert_lm_prediction_head.2} parent=35 // pred_check
          %p313 = pneg %p312
        $region42: #{bit_bert_lm_prediction_head.2} parent=35 // pred_check_branch
          %315 = sbr.rel (%p313) target = $region44
        $region43: #{bit_bert_lm_prediction_head.2} parent=35 // pred_region
          %v316 = vld [vmem:[%s298] sm:$0xff]
          %v317 = vld [vmem:[%s298 + $0x8] sm:$0xff]
          %v318 = vld [vmem:[%s298 + $0x10] sm:$0xff]
          %v319 = vld [vmem:[%s298 + $0x18] sm:$0xff]
          %v320 = vld [vmem:[%s298 + $0x20] sm:$0xff]
          %v321 = vld [vmem:[%s298 + $0x28] sm:$0xff]
          %v322 = vld [vmem:[%s298 + $0x30] sm:$0xff]
          %v323 = vld [vmem:[%s298 + $0x38] sm:$0xff]
          %v324 = vld [vmem:[%s298 + $0x40] sm:$0xff]
          %v325 = vld [vmem:[%s298 + $0x48] sm:$0xff]
          %v326 = vld [vmem:[%s298 + $0x50] sm:$0xff]
          %v327 = vld [vmem:[%s298 + $0x58] sm:$0xff]
          %v328 = vld [vmem:[%s298 + $0x60] sm:$0xff]
          %v329 = vld [vmem:[%s298 + $0x68] sm:$0xff]
          %v330 = vld [vmem:[%s298 + $0x70] sm:$0xff]
          %v331 = vld [vmem:[%s298 + $0x78] sm:$0xff]
          %332 = vxpose.xlu0.b32.start [1/16] %v316, 128
          %333 = vxpose.xlu0.b32.cont [2/16] %v317, 128
          %334 = vxpose.xlu0.b32.cont [3/16] %v318, 128
          %335 = vxpose.xlu0.b32.cont [4/16] %v319, 128
          %336 = vxpose.xlu0.b32.cont [5/16] %v320, 128
          %337 = vxpose.xlu0.b32.cont [6/16] %v321, 128
          %338 = vxpose.xlu0.b32.cont [7/16] %v322, 128
          %339 = vxpose.xlu0.b32.cont [8/16] %v323, 128
          %340 = vxpose.xlu0.b32.cont [9/16] %v324, 128
          %341 = vxpose.xlu0.b32.cont [10/16] %v325, 128
          %342 = vxpose.xlu0.b32.cont [11/16] %v326, 128
          %343 = vxpose.xlu0.b32.cont [12/16] %v327, 128
          %344 = vxpose.xlu0.b32.cont [13/16] %v328, 128
          %345 = vxpose.xlu0.b32.cont [14/16] %v329, 128
          %346 = vxpose.xlu0.b32.cont [15/16] %v330, 128
          %347 = vxpose.xlu0.b32.end [16/16] %v331, 128
          %v348 = vpop.trf.xlu0
          %v349 = vpop.trf.xlu0
          %v350 = vpop.trf.xlu0
          %v351 = vpop.trf.xlu0
          %v352 = vpop.trf.xlu0
          %v353 = vpop.trf.xlu0
          %v354 = vpop.trf.xlu0
          %v355 = vpop.trf.xlu0
          %v356 = vpop.trf.xlu0
          %v357 = vpop.trf.xlu0
          %v358 = vpop.trf.xlu0
          %v359 = vpop.trf.xlu0
          %v360 = vpop.trf.xlu0
          %v361 = vpop.trf.xlu0
          %v362 = vpop.trf.xlu0
          %v363 = vpop.trf.xlu0
          %v364 = vand.u32 2147483647, %v348
          %v365 = vand.u32 2147483647, %v349
          %v366 = vand.u32 2147483647, %v350
          %v367 = vand.u32 2147483647, %v351
          %v368 = vmax.f32 %v364, %v365
          %v369 = vmax.f32 %v366, %v367
          %v370 = vmax.f32 %v368, %v369
          %v371 = vrot.slane %v370, 4
          %v372 = vmax.f32 %v370, %v371
          %v373 = vrot.slane %v372, 2
          %v374 = vmax.f32 %v372, %v373
          %v375 = vrot.slane %v374, 1
          %v376 = vmax.f32 %v374, %v375
          %v377 = vrcp.pop 127.0
          %v378 = vmul.f32 %v376, %v377
          %v379 = vmax.f32 %v378, 1e-08
          %v380 = vrcp.pop %v379
          %v381 = vmul.f32 %v348, %v380
          %v382 = vmul.f32 %v349, %v380
          %v383 = vmul.f32 %v350, %v380
          %v384 = vmul.f32 %v351, %v380
          %v385 = vround.ne.pseudo %v381
          %v386 = vround.ne.pseudo %v382
          %v387 = vround.ne.pseudo %v383
          %v388 = vround.ne.pseudo %v384
          %v389 = vmax.f32 %v385, -128.0
          %v390 = vmax.f32 %v386, -128.0
          %v391 = vmax.f32 %v387, -128.0
          %v392 = vmax.f32 %v388, -128.0
          %v393 = vmin.f32 %v389, 127.0
          %v394 = vmin.f32 %v390, 127.0
          %v395 = vmin.f32 %v391, 127.0
          %v396 = vmin.f32 %v392, 127.0
          %v397 = vmul.f32 %v393, %v379
          %v398 = vmul.f32 %v394, %v379
          %v399 = vmul.f32 %v395, %v379
          %v400 = vmul.f32 %v396, %v379
          %401 = vst [vmem:[#allocation2] sm:$0xff] %v397
          %402 = vst [vmem:[#allocation2 + $0x8] sm:$0xff] %v398
          %403 = vst [vmem:[#allocation2 + $0x10] sm:$0xff] %v399
          %404 = vst [vmem:[#allocation2 + $0x18] sm:$0xff] %v400
          %405 = vst [vmem:[#allocation3] sm:$0x1] inf
          %406 = vst [vmem:[#allocation4] sm:$0x1] -inf
        $region44: #{bit_bert_lm_prediction_head.2} parent=35 // pred_fallthru
          _
        %s407 = sld [smem:[#allocation5]]
        %s408 = sld [smem:[#allocation5 + $0x1]]
        %s409 = sld [smem:[#allocation5 + $0x2]]
        %s410 = smul.u32 %s24, 16
        %s411 = scalar_lea.vmem %s1, %s410
        %v412 = vld [vmem:[%s411] sm:$0xff]
        %v413 = vld [vmem:[%s411 + $0x8] sm:$0xff]
        %v414 = vstv %s407
        %v415 = vrcp.pop %v414
        %v416 = vmul.f32 %v412, %v415
        %v417 = vmul.f32 %v413, %v415
        %v418 = vstv %s408
        %v419 = vadd.f32 %v416, %v418
        %v420 = vadd.f32 %v417, %v418
        %v421 = vround.ne.pseudo %v419
        %v422 = vround.ne.pseudo %v420
        %v423 = vmax.f32 %v421, 0.0
        %v424 = vmax.f32 %v422, 0.0
        %v425 = vmin.f32 %v423, 255.0
        %v426 = vmin.f32 %v424, 255.0
        %p427 = scmp.gt.f32.partialorder %s409, 0.5
        %v428 = vsub.f32 %v425, %v418
        %v429 = vsub.f32 %v426, %v418
        %v430 = vmul.f32 %v428, %v414
        %v431 = vmul.f32 %v429, %v414
        %s432 = scalar_select %p427, 1, 0
        %v433 = vstv %s432
        %vm434 = vcmp.eq.s32.totalorder %v433, 1
        %v435 = vsel %vm434, %v430, %v412
        %v436 = vsel %vm434, %v431, %v413
        %v437 = vld [vmem:[#allocation2] sm:$0xff]
        %v438 = vld [vmem:[#allocation2 + $0x8] sm:$0xff]
        %v439 = vld [vmem:[#allocation2 + $0x10] sm:$0xff]
        %v440 = vld [vmem:[#allocation2 + $0x18] sm:$0xff]
        %v441 = vld [vmem:[%s302] sm:$0x1]
        %v443 = vlaneseq
        %v444 = vshrl.u32 %v443, 7
        %v445 = vsub.s32 0, %v444
        %v446 = vrot.slane %v441, %v445
        %vm448 = vcmask 261120
        %v450 = vsel %vm448, %v435, 0
        %v453 = vsel %vm448, %v436, 0
        %455 = vmatprep.subr.mxu0 0.0
        %456 = vmatpush1.msra.mxu0 %v437
        %457 = vmatprep.subr.mxu0 0.0
        %458 = vmatpush1.msra.mxu0 %v438
        %459 = vmatprep.subr.mxu0 0.0
        %460 = vmatpush1.msra.mxu0 %v439
        %461 = vmatprep.subr.mxu0 0.0
        %462 = vmatpush1.msra.mxu0 %v440
        %463 = vmatprep.subr.mxu0 0.0
        %464 = vmatpush1.msra.mxu0 0.0
        %465 = vmatprep.subr.mxu0 0.0
        %466 = vmatpush1.msra.mxu0 0.0
        %467 = vmatprep.subr.mxu0 0.0
        %468 = vmatpush1.msra.mxu0 0.0
        %469 = vmatprep.subr.mxu0 0.0
        %470 = vmatpush1.msra.mxu0 0.0
        %471 = vmatprep.subr.mxu0 0.0
        %472 = vmatpush1.msra.mxu0 0.0
        %473 = vmatprep.subr.mxu0 0.0
        %474 = vmatpush1.msra.mxu0 0.0
        %475 = vmatprep.subr.mxu0 0.0
        %476 = vmatpush1.msra.mxu0 0.0
        %477 = vmatprep.subr.mxu0 0.0
        %478 = vmatpush1.msra.mxu0 0.0
        %479 = vmatprep.subr.mxu0 0.0
        %480 = vmatpush1.msra.mxu0 0.0
        %481 = vmatprep.subr.mxu0 0.0
        %482 = vmatpush1.msra.mxu0 0.0
        %483 = vmatprep.subr.mxu0 0.0
        %484 = vmatpush1.msra.mxu0 0.0
        %485 = vmatprep.subr.mxu0 0.0
        %486 = vmatpush1.msra.mxu0 0.0
        %487 = vmatprep.subr.mxu0 0.0
        %488 = vmatpush1.msra.mxu0 0.0
        %489 = vmatprep.subr.mxu0 0.0
        %490 = vmatpush1.msra.mxu0 0.0
        %491 = vmatprep.subr.mxu0 0.0
        %492 = vmatpush1.msra.mxu0 0.0
        %493 = vmatprep.subr.mxu0 0.0
        %494 = vmatpush1.msra.mxu0 0.0
        %495 = vmatprep.subr.mxu0 0.0
        %496 = vmatpush1.msra.mxu0 0.0
        %497 = vmatprep.subr.mxu0 0.0
        %498 = vmatpush1.msra.mxu0 0.0
        %499 = vmatprep.subr.mxu0 0.0
        %500 = vmatpush1.msra.mxu0 0.0
        %501 = vmatprep.subr.mxu0 0.0
        %502 = vmatpush1.msra.mxu0 0.0
        %503 = vmatprep.subr.mxu0 0.0
        %504 = vmatpush1.msra.mxu0 0.0
        %505 = vmatprep.subr.mxu0 0.0
        %506 = vmatpush1.msra.mxu0 0.0
        %507 = vmatprep.subr.mxu0 0.0
        %508 = vmatpush1.msra.mxu0 0.0
        %509 = vmatprep.subr.mxu0 0.0
        %510 = vmatpush1.msra.mxu0 0.0
        %511 = vmatprep.subr.mxu0 0.0
        %512 = vmatpush1.msra.mxu0 0.0
        %513 = vmatprep.subr.mxu0 0.0
        %514 = vmatpush1.msra.mxu0 0.0
        %515 = vmatprep.subr.mxu0 0.0
        %516 = vmatpush1.msra.mxu0 0.0
        %517 = vmatprep.subr.mxu0 0.0
        %518 = vmatpush1.msra.mxu0 0.0
        %519 = vmatprep.mubr.f32.mxu0 0.0
        %520 = vmatmul.mubr.f32.gmra.mrb[0].mxu0 %v450
        %v521 = vpop.f32.mrb[0].mxu0
        %v522 = vadd.f32 %v446, %v521
        %v523 = vpop.f32.mrb[0].mxu0
        %524 = vmatprep.mubr.f32.mxu0 0.0
        %525 = vmatmul.mubr.f32.gmra.mrb[0].mxu0 %v453
        %v526 = vpop.f32.mrb[0].mxu0
        %v527 = vadd.f32 %v446, %v526
        %v528 = vpop.f32.mrb[0].mxu0
        %529 = vdwg.mxu0
        %530 = vst [vmem:[%s281] sm:$0xff] %v522
        %531 = vst [vmem:[%s281 + $0x8] sm:$0xff] %v527
        %v532 = vld [vmem:[#allocation3] sm:$0x1]
        %v533 = vmin.f32 %v522, %v527
        %v534 = vrot.slane %v533, 4
        %v535 = vmin.f32 %v533, %v534
        %v536 = vrot.slane %v535, 2
        %v537 = vmin.f32 %v535, %v536
        %v538 = vrot.slane %v537, 1
        %v539 = vmin.f32 %v537, %v538
        %v540 = vmin.f32 %v532, %v539
        %541 = vst [vmem:[#allocation3] sm:$0x1] %v540
        %v542 = vld [vmem:[#allocation4] sm:$0x1]
        %v543 = vmax.f32 %v522, %v527
        %v544 = vrot.slane %v543, 4
        %v545 = vmax.f32 %v543, %v544
        %v546 = vrot.slane %v545, 2
        %v547 = vmax.f32 %v545, %v546
        %v548 = vrot.slane %v547, 1
        %v549 = vmax.f32 %v547, %v548
        %v550 = vmax.f32 %v542, %v549
        %551 = vst [vmem:[#allocation4] sm:$0x1] %v550
        // Predicated region
        $region45: #{bit_bert_lm_prediction_head.2} parent=35 // pred_check
          %p552 = pneg %p312
        $region46: #{bit_bert_lm_prediction_head.2} parent=35 // pred_check_branch
          %554 = sbr.rel (%p552) target = $region48
        $region47: #{bit_bert_lm_prediction_head.2} parent=35 // pred_region
          %v555 = vld [vmem:[#allocation3] sm:$0x1]
          %vm556 = vcmask 1040384
          %v557 = vsel %vm556, %v555, inf
          %558 = vmin.xlane.f32.xlu0 %v557
          %v559 = vpop.xlane.xlu0 %558
          %v560 = vld [vmem:[#allocation4] sm:$0x1]
          %v561 = vsel %vm556, %v560, -inf
          %562 = vmax.xlane.f32.xlu0 %v561
          %v563 = vpop.xlane.xlu0 %562
          %v564 = vlaneseq
          %v565 = vshrl.u32 %v564, 7
          %v566 = vsub.s32 0, %v565
          %v567 = vrot.slane %v559, %v566
          %568 = vst [vmem:[%s307] sm:$0xff] %v567
          %v569 = vlaneseq
          %v570 = vshrl.u32 %v569, 7
          %v571 = vsub.s32 0, %v570
          %v572 = vrot.slane %v563, %v571
          %573 = vst [vmem:[%s311] sm:$0xff] %v572
        $region48: #{bit_bert_lm_prediction_head.2} parent=35 // pred_fallthru
          _
        %s574 = sand.u32 %s135, 1
        %s575 = sand.u32 %s135, 1
        %s576 = smul.addr %s575, 16
        %s577 = scalar_lea.vmem [#allocation7], %s576
        %p578 = scmp.lt.s32.totalorder %s23, 1
        %s579 = scalar_select %p578, %s23, 1
        %s580 = smul.addr %s579, 8
        %s581 = scalar_lea.vmem %s5, %s580
        %p582 = scmp.lt.s32.totalorder %s23, 1
        %s583 = scalar_select %p582, %s23, 1
        %s584 = smul.addr %s583, 8
        %s585 = scalar_lea.vmem %s6, %s584
        // Predicated region
        $region49: #{bit_bert_lm_prediction_head.2} parent=35 // pred_check
          %p586 = pneg %p145
        $region50: #{bit_bert_lm_prediction_head.2} parent=35 // pred_check_branch
          %588 = sbr.rel (%p586) target = $region52
        $region51: #{bit_bert_lm_prediction_head.2} parent=35 // pred_region
          %s589 = smul.u32 2, %s24
          %s590 = smul.addr %s589, 2
          %s591 = sadd.s32 %s23, %s590
          %s592 = smul.addr %s591, 8
          %s593 = scalar_lea.vmem %s4, %s592
          // Predicated region
          $region53: #{bit_bert_lm_prediction_head.2} parent=51 // pred_check
            _
          $region54: #{bit_bert_lm_prediction_head.2} parent=51 // pred_check_branch
            %595 = sbr.rel (0) target = $region56
          $region55: #{bit_bert_lm_prediction_head.2} parent=51 // pred_region
            // Predicated region
            $region57: #{bit_bert_lm_prediction_head.2} parent=55 // pred_check
              _
            $region58: #{bit_bert_lm_prediction_head.2} parent=55 // pred_check_branch
              %597 = sbr.rel (0) target = $region60
            $region59: #{bit_bert_lm_prediction_head.2} parent=55 // pred_region
              // Predicated region
              $region72: #{bit_bert_lm_prediction_head.2} parent=59 // pred_check
                _
              $region73: #{bit_bert_lm_prediction_head.2} parent=59 // pred_check_branch
                %614 = sbr.rel (0) target = $region75
              $region74: #{bit_bert_lm_prediction_head.2} parent=59 // pred_region
                loop: start=0, step=1, limit=1
                $region76: #{bit_bert_lm_prediction_head.2} parent=74 // loop_pre_header
                  _
                $region77: #{bit_bert_lm_prediction_head.2} parent=74 // loop_header
                  %s616 = sphi 0, %s620
                  %p617 = scmp.ge.s32.totalorder %s616, 1
                  %s621 = sphi %s577, %s577
                  %s622 = sphi %s593, %s593
                $region78: #{bit_bert_lm_prediction_head.2} parent=74 // loop_header_branch
                  %619 = sbr.rel (%p617) target = $region82
                $region79: #{bit_bert_lm_prediction_head.2} parent=74 // loop_body
                  %v623 = vld [vmem:[%s621] sm:$0xff]
                  %624 = vst [vmem:[%s622] sm:$0xff] %v623
                  %v625 = vld [vmem:[%s621 + $0x8] sm:$0xff]
                  %626 = vst [vmem:[%s622 + $0x10] sm:$0xff] %v625
                $region80: #{bit_bert_lm_prediction_head.2} parent=74 // loop_footer
                  %s620 = sadd.s32 1, %s616
                $region81: #{bit_bert_lm_prediction_head.2} parent=74 // loop_footer_branch
                  %615 = sbr.rel target = $region77
                $region82: #{bit_bert_lm_prediction_head.2} parent=74 // loop_exit
                  _
              $region75: #{bit_bert_lm_prediction_head.2} parent=59 // pred_fallthru
                _
              // Predicated region
              $region83: #{bit_bert_lm_prediction_head.2} parent=59 // pred_check
                _
              $region84: #{bit_bert_lm_prediction_head.2} parent=59 // pred_check_branch
                %628 = sbr.rel target = $region86
              $region85: #{bit_bert_lm_prediction_head.2} parent=59 // pred_region
                _
              $region86: #{bit_bert_lm_prediction_head.2} parent=59 // pred_fallthru
                _
            $region60: #{bit_bert_lm_prediction_head.2} parent=55 // pred_fallthru
              _
            // Predicated region
            $region61: #{bit_bert_lm_prediction_head.2} parent=55 // pred_check
              _
            $region62: #{bit_bert_lm_prediction_head.2} parent=55 // pred_check_branch
              %599 = sbr.rel target = $region64
            $region63: #{bit_bert_lm_prediction_head.2} parent=55 // pred_region
              loop: start=0, step=1, limit=1
              $region65: #{bit_bert_lm_prediction_head.2} parent=63 // loop_pre_header
                _
              $region66: #{bit_bert_lm_prediction_head.2} parent=63 // loop_header
                %s602 = sphi 0, %s606
                %p603 = scmp.ge.s32.totalorder %s602, 1
                %s607 = sphi %s577, %s577
                %s608 = sphi %s593, %s593
              $region67: #{bit_bert_lm_prediction_head.2} parent=63 // loop_header_branch
                %605 = sbr.rel (%p603) target = $region71
              $region68: #{bit_bert_lm_prediction_head.2} parent=63 // loop_body
                %v609 = vld [vmem:[%s607] sm:$0xff]
                %610 = vst [vmem:[%s608] sm:$0xff] %v609
                %v611 = vld [vmem:[%s607 + $0x8] sm:$0xff]
                %612 = vst [vmem:[%s608 + $0x10] sm:$0xff] %v611
              $region69: #{bit_bert_lm_prediction_head.2} parent=63 // loop_footer
                %s606 = sadd.s32 1, %s602
              $region70: #{bit_bert_lm_prediction_head.2} parent=63 // loop_footer_branch
                %601 = sbr.rel target = $region66
              $region71: #{bit_bert_lm_prediction_head.2} parent=63 // loop_exit
                _
            $region64: #{bit_bert_lm_prediction_head.2} parent=55 // pred_fallthru
              _
          $region56: #{bit_bert_lm_prediction_head.2} parent=51 // pred_fallthru
            _
          %629 = vnop
        $region52: #{bit_bert_lm_prediction_head.2} parent=35 // pred_fallthru
          _
        // Predicated region
        $region87: #{bit_bert_lm_prediction_head.2} parent=35 // pred_check
          %p630 = pneg %p171
        $region88: #{bit_bert_lm_prediction_head.2} parent=35 // pred_check_branch
          %632 = sbr.rel (%p630) target = $region90
        $region89: #{bit_bert_lm_prediction_head.2} parent=35 // pred_region
          _
        $region90: #{bit_bert_lm_prediction_head.2} parent=35 // pred_fallthru
          _
        // Predicated region
        $region91: #{bit_bert_lm_prediction_head.2} parent=35 // pred_check
          %p633 = pneg %p197
        $region92: #{bit_bert_lm_prediction_head.2} parent=35 // pred_check_branch
          %635 = sbr.rel (%p633) target = $region94
        $region93: #{bit_bert_lm_prediction_head.2} parent=35 // pred_region
          _
        $region94: #{bit_bert_lm_prediction_head.2} parent=35 // pred_fallthru
          _
      $region36: #{bit_bert_lm_prediction_head.2} parent=5 // pred_fallthru
        _
      %p636 = scmp.le.s32.totalorder 2, %s14
      // Predicated region
      $region95: #{bit_bert_lm_prediction_head.2} parent=5 // pred_check
        %p637 = pneg %p636
      $region96: #{bit_bert_lm_prediction_head.2} parent=5 // pred_check_branch
        %639 = sbr.rel (%p637) target = $region98
      $region97: #{bit_bert_lm_prediction_head.2} parent=5 // pred_region
        %s640 = ssub.s32 %s14, 2
        // Predicated region
        $region99: #{bit_bert_lm_prediction_head.2} parent=97 // pred_check
          %p641 = pneg %p151
        $region100: #{bit_bert_lm_prediction_head.2} parent=97 // pred_check_branch
          %643 = sbr.rel (%p641) target = $region102
        $region101: #{bit_bert_lm_prediction_head.2} parent=97 // pred_region
          %s644 = sand.u32 %s136, 1
          %s645 = sand.u32 %s136, 1
          %s646 = smul.addr %s645, 16
          %s647 = scalar_lea.vmem [#allocation7], %s646
        $region102: #{bit_bert_lm_prediction_head.2} parent=97 // pred_fallthru
          _
        // Predicated region
        $region103: #{bit_bert_lm_prediction_head.2} parent=97 // pred_check
          %p648 = pneg %p177
        $region104: #{bit_bert_lm_prediction_head.2} parent=97 // pred_check_branch
          %650 = sbr.rel (%p648) target = $region106
        $region105: #{bit_bert_lm_prediction_head.2} parent=97 // pred_region
          %p651 = scmp.lt.s32.totalorder %s25, 1
          %s652 = scalar_select %p651, %s25, 1
          %s653 = smul.addr %s652, 8
          %s654 = scalar_lea.vmem %s5, %s653
        $region106: #{bit_bert_lm_prediction_head.2} parent=97 // pred_fallthru
          _
        // Predicated region
        $region107: #{bit_bert_lm_prediction_head.2} parent=97 // pred_check
          %p655 = pneg %p203
        $region108: #{bit_bert_lm_prediction_head.2} parent=97 // pred_check_branch
          %657 = sbr.rel (%p655) target = $region110
        $region109: #{bit_bert_lm_prediction_head.2} parent=97 // pred_region
          %p658 = scmp.lt.s32.totalorder %s25, 1
          %s659 = scalar_select %p658, %s25, 1
          %s660 = smul.addr %s659, 8
          %s661 = scalar_lea.vmem %s6, %s660
        $region110: #{bit_bert_lm_prediction_head.2} parent=97 // pred_fallthru
          _
      $region98: #{bit_bert_lm_prediction_head.2} parent=5 // pred_fallthru
        _
    $region6: #{bit_bert_lm_prediction_head.2} parent=1 // loop_footer
      %s18 = sadd.s32 1, %s14
    $region7: #{bit_bert_lm_prediction_head.2} parent=1 // loop_footer_branch
      %13 = sbr.rel target = $region3
    $region8: #{bit_bert_lm_prediction_head.2} parent=1 // loop_exit
      _
    %662 = vsyncpa [#allocation6], 1
    %s663 = scalar_lea.sflag [#allocation6], 1
    %664 = vsyncpa %s663, 1

</llo_original>
